<compile_context>
chip_gen: v5e
topology: v5e:2x2
jax: 0.10.0
libtpu: 0.0.40
codegen_flags: <defaults>
</compile_context>

<pallas_src>
import functools

import jax
import jax.numpy as jnp
from jax.experimental import pallas as pl
from jax.experimental.pallas import tpu as pltpu

LANE = 128
SUB = 8                 # f32 accumulator sublane height
MAX_BLOCK_ROWS = 2048   # (2048, 128) f32 tile = 1 MiB/input/buffer (~4 MiB pipelined)
NUM_TC = 2              # v7x: 2 TensorCores/chip; on v5e/v6e the "parallel"
                        # core axis just serializes (negligible overhead).


def _combo_kernel(x_ref, t_ref, bce_ref, inter_ref, denom_ref, *,
                  block_rows, g_inner, valid_rows, need_mask, binary_targets):
    c = pl.program_id(0)   # core split (parallel axis)
    i = pl.program_id(1)   # streaming blocks per core (reduction axis)

    # Per-core partial-sum outputs keep the same block index for every i, so
    # they stay resident in VMEM and act as accumulators.
    @pl.when(i == 0)
    def _():
        bce_ref[...] = jnp.zeros_like(bce_ref)
        inter_ref[...] = jnp.zeros_like(inter_ref)
        denom_ref[...] = jnp.zeros_like(denom_ref)

    p = x_ref[...].astype(jnp.float32)
    t = t_ref[...].astype(jnp.float32)

    if need_mask:
        # Rows >= valid_rows are either grid padding (clamped duplicate block)
        # or the partial last block; zero them so they contribute exactly 0.
        row0 = (c * g_inner + i) * block_rows
        rid = row0 + jax.lax.broadcasted_iota(jnp.int32, (block_rows, LANE), 0)
        keep = rid < valid_rows
        p = jnp.where(keep, p, 0.0)
        t = jnp.where(keep, t, 0.0)

    pt = p * t
    if binary_targets:
        # Single transcendental per element, exact for t in {0, 1}:
        #   BCE = -log(t*p + (1-t)*(1-p)); clamp matches torch's -100 clamp.
        # Zero padding (p = t = 0) gives log(1) = 0.
        nbce = jnp.maximum(jnp.log(1.0 - p - t + 2.0 * pt), -100.0)
    else:
        # torch.nn.BCELoss clamps each log term at -100; refactored so t is
        # used once.  The per-element negation is folded into the epilogue.
        log_p = jnp.maximum(jnp.log(p), -100.0)
        log_1mp = jnp.maximum(jnp.log(1.0 - p), -100.0)
        nbce = log_1mp + t * (log_p - log_1mp)

    acc_rows = bce_ref.shape[0]

    def fold(v):
        # (block_rows, 128) -> (acc_rows, 128) with elementwise VPU adds only;
        # the cross-lane/sublane reduction happens once, in the JAX epilogue.
        if acc_rows == SUB:
            return jnp.sum(v.reshape(block_rows // SUB, SUB, LANE), axis=0)
        return jnp.sum(v, axis=0, keepdims=True)   # tiny single-block inputs

    bce_ref[...] += fold(nbce)
    inter_ref[...] += fold(pt)
    denom_ref[...] += fold(p + t)


def combo_loss(inputs, targets, alpha=0.5, beta=0.5, smooth=1e-6,
               binary_targets=False):
    """JAX/Pallas equivalent of ComboLoss(alpha, beta)(inputs, targets)."""
    assert inputs.shape == targets.shape
    n = int(inputs.size)

    def prep(a):
        a = jnp.reshape(a, (-1,))
        d = jnp.dtype(a.dtype)
        if d in (jnp.dtype(jnp.float32), jnp.dtype(jnp.bfloat16)):
            return a                      # native fast path, cast after load
        if d == jnp.dtype(jnp.bool_):
            return a.astype(jnp.int8)     # 1-byte mask path (less HBM traffic)
        if d in (jnp.dtype(jnp.int8), jnp.dtype(jnp.uint8)):
            return a
        return a.astype(jnp.float32)

    x = prep(inputs)
    t = prep(targets)

    # Lane-dense (rows, 128) view.  No pad / copy when n % 128 == 0 (typical
    # power-of-two NCHW segmentation shapes, incl. the demo).
    rem = n % LANE
    if rem:
        # TODO(synk): a flat-1D manual-DMA path would avoid this full-copy pad
        # for non-128-aligned sizes; zero padding contributes 0 to every sum.
        x = jnp.pad(x, (0, LANE - rem))
        t = jnp.pad(t, (0, LANE - rem))
    rows = pl.cdiv(n, LANE)
    x2 = x.reshape(rows, LANE)
    t2 = t.reshape(rows, LANE)

    # Tiling / grid.  (MAX_BLOCK_ROWS=2048 fits comfortably in the default
    # scoped-VMEM limit on all generations; sweep 2048-4096 / Buffered(3) for
    # marginal gains on very large inputs.)
    if rows <= MAX_BLOCK_ROWS:
        block_rows = rows                 # single full-array block (always legal)
        nblocks = 1
    else:
        block_rows = MAX_BLOCK_ROWS       # multiple of 32 -> legal for all dtypes
        nblocks = pl.cdiv(rows, block_rows)
    ncores = NUM_TC if nblocks >= NUM_TC else 1
    g_inner = pl.cdiv(nblocks, ncores)
    need_mask = (ncores * g_inner * block_rows) != rows
    acc_rows = SUB if block_rows % SUB == 0 else 1

    if ncores * g_inner > nblocks:
        # Clamp so the DMA stays in bounds; the kernel masks by the unclamped
        # logical row index, so clamped duplicate blocks contribute exactly 0.
        def in_map(c, i):
            return (jnp.minimum(c * g_inner + i, nblocks - 1), 0)
    else:
        def in_map(c, i):
            return (c * g_inner + i, 0)

    kernel = functools.partial(
        _combo_kernel,
        block_rows=block_rows,
        g_inner=g_inner,
        valid_rows=rows,
        need_mask=need_mask,
        binary_targets=bool(binary_targets),
    )

    part_shape = jax.ShapeDtypeStruct((ncores, acc_rows, LANE), jnp.float32)
    part_spec = pl.BlockSpec((None, acc_rows, LANE), lambda c, i: (c, 0, 0))

    bce_parts, inter_parts, denom_parts = pl.pallas_call(
        kernel,
        out_shape=(part_shape, part_shape, part_shape),
        grid_spec=pltpu.PrefetchScalarGridSpec(
            num_scalar_prefetch=0,
            grid=(ncores, g_inner),
            in_specs=[
                pl.BlockSpec((block_rows, LANE), in_map),
                pl.BlockSpec((block_rows, LANE), in_map),
            ],
            out_specs=[part_spec, part_spec, part_spec],
        ),
        compiler_params=pltpu.CompilerParams(
            dimension_semantics=("parallel", "arbitrary"),
        ),
        cost_estimate=pl.CostEstimate(
            flops=12 * n,
            transcendentals=(1 if binary_targets else 2) * n,
            bytes_accessed=int(x2.nbytes) + int(t2.nbytes)
            + 3 * ncores * acc_rows * LANE * 4,
        ),
    )(x2, t2)

    # Tiny JAX epilogue: cross-core / cross-lane reduction + scalar combine
    # (BCE negation and /n folded here, saving a VALU op per element).
    # TODO(synk): for n >= ~1e8 under tight tolerances, per-lane f32 running
    # sums accumulate rounding error; a compensated add would fix it.
    bce_loss = -jnp.sum(bce_parts) / float(n)
    inter = jnp.sum(inter_parts)
    denom = jnp.sum(denom_parts)
    dice = (2.0 * inter + float(smooth)) / (denom + float(smooth))
    return float(alpha) * bce_loss + float(beta) * (1.0 - dice)


def _reference_combo_loss(inputs, targets, alpha=0.5, beta=0.5, smooth=1e-6):
    p = jnp.reshape(inputs, (-1,)).astype(jnp.float32)
    t = jnp.reshape(targets, (-1,)).astype(jnp.float32)
    log_p = jnp.maximum(jnp.log(p), -100.0)
    log_1mp = jnp.maximum(jnp.log(1.0 - p), -100.0)
    bce = jnp.mean(-(t * log_p + (1.0 - t) * log_1mp))
    inter = jnp.sum(p * t)
    dice = (2.0 * inter + smooth) / (jnp.sum(p) + jnp.sum(t) + smooth)
    return alpha * bce + beta * (1.0 - dice)


if __name__ == "__main__":
    key = jax.random.PRNGKey(0)
    k1, k2 = jax.random.split(key)

    # Small NCHW-shaped probabilities / binary targets, as BCELoss expects.
    shape = (2, 4, 16, 16)
    inputs = jax.nn.sigmoid(jax.random.normal(k1, shape, dtype=jnp.float32))
    targets = (jax.random.uniform(k2, shape) > 0.5).astype(jnp.float32)

    ref = _reference_combo_loss(inputs, targets)

    loss = combo_loss(inputs, targets)
    loss = jax.block_until_ready(loss)
    assert jnp.allclose(loss, ref, atol=1e-5, rtol=1e-5), (loss, ref)

    # Also exercise the single-transcendental binary-target path.
    loss_bin = combo_loss(inputs, targets, binary_targets=True)
    loss_bin = jax.block_until_ready(loss_bin)
    assert jnp.allclose(loss_bin, ref, atol=1e-5, rtol=1e-5), (loss_bin, ref)

    print("KERNEL_OK")
</pallas_src>

<mosaic_0001>
module attributes {stable_mosaic.version = 11 : i64} {
  func.func @_combo_kernel(%arg0: i32, %arg1: i32, %arg2: memref<16x128xf32, #tpu.memory_space<vmem>>, %arg3: memref<16x128xf32, #tpu.memory_space<vmem>>, %arg4: memref<1x8x128xf32, #tpu.memory_space<vmem>>, %arg5: memref<1x8x128xf32, #tpu.memory_space<vmem>>, %arg6: memref<1x8x128xf32, #tpu.memory_space<vmem>>) attributes {dimension_semantics = [#tpu.dimension_semantics<parallel>, #tpu.dimension_semantics<arbitrary>], iteration_bounds = array<i64: 1, 1>, scalar_prefetch = 0 : i64, scratch_operands = 0 : i64, tpu.core_type = #tpu.core_type<tc>, window_params = [{transform_indices = @transform_0, window_bounds = array<i64: 16, 128>}, {transform_indices = @transform_1, window_bounds = array<i64: 16, 128>}, {transform_indices = @transform_2, window_bounds = array<i64: 1, 8, 128>}, {transform_indices = @transform_3, window_bounds = array<i64: 1, 8, 128>}, {transform_indices = @transform_4, window_bounds = array<i64: 1, 8, 128>}]} {
    %c0_i32 = arith.constant 0 : i32
    %0 = arith.cmpi eq, %arg1, %c0_i32 : i32
    %1 = arith.extui %0 : i1 to i32
    %c0_i32_0 = arith.constant 0 : i32
    %2 = arith.cmpi ne, %1, %c0_i32_0 : i32
    scf.if %2 {
      %cst_27 = arith.constant 0.000000e+00 : f32
      %42 = vector.broadcast %cst_27 : f32 to vector<8x128xf32>
      %c0_28 = arith.constant 0 : index
      %c0_29 = arith.constant 0 : index
      %c0_30 = arith.constant 0 : index
      %43 = vector.load %arg4[%c0_28, %c0_29, %c0_30] : memref<1x8x128xf32, #tpu.memory_space<vmem>>, vector<1x8x128xf32>
      %44 = vector.shape_cast %43 : vector<1x8x128xf32> to vector<8x128xf32>
      %45 = vector.shape_cast %42 : vector<8x128xf32> to vector<1x8x128xf32>
      tpu.vector_store %arg4[%c0_28, %c0_29, %c0_30], %45 {strides = array<i32>} : memref<1x8x128xf32, #tpu.memory_space<vmem>>, vector<1x8x128xf32>,
      %cst_31 = arith.constant 0.000000e+00 : f32
      %46 = vector.broadcast %cst_31 : f32 to vector<8x128xf32>
      %c0_32 = arith.constant 0 : index
      %c0_33 = arith.constant 0 : index
      %c0_34 = arith.constant 0 : index
      %47 = vector.load %arg5[%c0_32, %c0_33, %c0_34] : memref<1x8x128xf32, #tpu.memory_space<vmem>>, vector<1x8x128xf32>
      %48 = vector.shape_cast %47 : vector<1x8x128xf32> to vector<8x128xf32>
      %49 = vector.shape_cast %46 : vector<8x128xf32> to vector<1x8x128xf32>
      tpu.vector_store %arg5[%c0_32, %c0_33, %c0_34], %49 {strides = array<i32>} : memref<1x8x128xf32, #tpu.memory_space<vmem>>, vector<1x8x128xf32>,
      %cst_35 = arith.constant 0.000000e+00 : f32
      %50 = vector.broadcast %cst_35 : f32 to vector<8x128xf32>
      %c0_36 = arith.constant 0 : index
      %c0_37 = arith.constant 0 : index
      %c0_38 = arith.constant 0 : index
      %51 = vector.load %arg6[%c0_36, %c0_37, %c0_38] : memref<1x8x128xf32, #tpu.memory_space<vmem>>, vector<1x8x128xf32>
      %52 = vector.shape_cast %51 : vector<1x8x128xf32> to vector<8x128xf32>
      %53 = vector.shape_cast %50 : vector<8x128xf32> to vector<1x8x128xf32>
      tpu.vector_store %arg6[%c0_36, %c0_37, %c0_38], %53 {strides = array<i32>} : memref<1x8x128xf32, #tpu.memory_space<vmem>>, vector<1x8x128xf32>,
    } else {
    }
    %c0 = arith.constant 0 : index
    %c0_1 = arith.constant 0 : index
    %3 = vector.load %arg2[%c0, %c0_1] : memref<16x128xf32, #tpu.memory_space<vmem>>, vector<16x128xf32>
    %c0_2 = arith.constant 0 : index
    %c0_3 = arith.constant 0 : index
    %4 = vector.load %arg3[%c0_2, %c0_3] : memref<16x128xf32, #tpu.memory_space<vmem>>, vector<16x128xf32>
    %5 = arith.mulf %3, %4 : vector<16x128xf32>
    %6 = math.log %3 : vector<16x128xf32>
    %cst = arith.constant -1.000000e+02 : f32
    %7 = vector.broadcast %cst : f32 to vector<16x128xf32>
    %8 = arith.maximumf %6, %7 : vector<16x128xf32>
    %cst_4 = arith.constant 1.000000e+00 : f32
    %9 = vector.broadcast %cst_4 : f32 to vector<16x128xf32>
    %10 = arith.subf %9, %3 : vector<16x128xf32>
    %11 = math.log %10 : vector<16x128xf32>
    %cst_5 = arith.constant -1.000000e+02 : f32
    %12 = vector.broadcast %cst_5 : f32 to vector<16x128xf32>
    %13 = arith.maximumf %11, %12 : vector<16x128xf32>
    %14 = arith.subf %8, %13 : vector<16x128xf32>
    %15 = arith.mulf %4, %14 : vector<16x128xf32>
    %16 = arith.addf %13, %15 : vector<16x128xf32>
    %c0_6 = arith.constant 0 : index
    %c0_7 = arith.constant 0 : index
    %c0_8 = arith.constant 0 : index
    %17 = vector.load %arg4[%c0_6, %c0_7, %c0_8] : memref<1x8x128xf32, #tpu.memory_space<vmem>>, vector<1x8x128xf32>
    %18 = vector.shape_cast %17 : vector<1x8x128xf32> to vector<8x128xf32>
    %19 = vector.shape_cast %16 : vector<16x128xf32> to vector<2x8x128xf32>
    %cst_9 = arith.constant dense<0.000000e+00> : vector<8x128xf32>
    %20 = vector.multi_reduction <add>, %19, %cst_9 [0] : vector<2x8x128xf32> to vector<8x128xf32>
    %21 = arith.addf %18, %20 : vector<8x128xf32>
    %c0_10 = arith.constant 0 : index
    %c0_11 = arith.constant 0 : index
    %c0_12 = arith.constant 0 : index
    %22 = vector.load %arg4[%c0_10, %c0_11, %c0_12] : memref<1x8x128xf32, #tpu.memory_space<vmem>>, vector<1x8x128xf32>
    %23 = vector.shape_cast %22 : vector<1x8x128xf32> to vector<8x128xf32>
    %24 = vector.shape_cast %21 : vector<8x128xf32> to vector<1x8x128xf32>
    tpu.vector_store %arg4[%c0_10, %c0_11, %c0_12], %24 {strides = array<i32>} : memref<1x8x128xf32, #tpu.memory_space<vmem>>, vector<1x8x128xf32>,
    %c0_13 = arith.constant 0 : index
    %c0_14 = arith.constant 0 : index
    %c0_15 = arith.constant 0 : index
    %25 = vector.load %arg5[%c0_13, %c0_14, %c0_15] : memref<1x8x128xf32, #tpu.memory_space<vmem>>, vector<1x8x128xf32>
    %26 = vector.shape_cast %25 : vector<1x8x128xf32> to vector<8x128xf32>
    %27 = vector.shape_cast %5 : vector<16x128xf32> to vector<2x8x128xf32>
    %cst_16 = arith.constant dense<0.000000e+00> : vector<8x128xf32>
    %28 = vector.multi_reduction <add>, %27, %cst_16 [0] : vector<2x8x128xf32> to vector<8x128xf32>
    %29 = arith.addf %26, %28 : vector<8x128xf32>
    %c0_17 = arith.constant 0 : index
    %c0_18 = arith.constant 0 : index
    %c0_19 = arith.constant 0 : index
    %30 = vector.load %arg5[%c0_17, %c0_18, %c0_19] : memref<1x8x128xf32, #tpu.memory_space<vmem>>, vector<1x8x128xf32>
    %31 = vector.shape_cast %30 : vector<1x8x128xf32> to vector<8x128xf32>
    %32 = vector.shape_cast %29 : vector<8x128xf32> to vector<1x8x128xf32>
    tpu.vector_store %arg5[%c0_17, %c0_18, %c0_19], %32 {strides = array<i32>} : memref<1x8x128xf32, #tpu.memory_space<vmem>>, vector<1x8x128xf32>,
    %c0_20 = arith.constant 0 : index
    %c0_21 = arith.constant 0 : index
    %c0_22 = arith.constant 0 : index
    %33 = vector.load %arg6[%c0_20, %c0_21, %c0_22] : memref<1x8x128xf32, #tpu.memory_space<vmem>>, vector<1x8x128xf32>
    %34 = vector.shape_cast %33 : vector<1x8x128xf32> to vector<8x128xf32>
    %35 = arith.addf %3, %4 : vector<16x128xf32>
    %36 = vector.shape_cast %35 : vector<16x128xf32> to vector<2x8x128xf32>
    %cst_23 = arith.constant dense<0.000000e+00> : vector<8x128xf32>
    %37 = vector.multi_reduction <add>, %36, %cst_23 [0] : vector<2x8x128xf32> to vector<8x128xf32>
    %38 = arith.addf %34, %37 : vector<8x128xf32>
    %c0_24 = arith.constant 0 : index
    %c0_25 = arith.constant 0 : index
    %c0_26 = arith.constant 0 : index
    %39 = vector.load %arg6[%c0_24, %c0_25, %c0_26] : memref<1x8x128xf32, #tpu.memory_space<vmem>>, vector<1x8x128xf32>
    %40 = vector.shape_cast %39 : vector<1x8x128xf32> to vector<8x128xf32>
    %41 = vector.shape_cast %38 : vector<8x128xf32> to vector<1x8x128xf32>
    tpu.vector_store %arg6[%c0_24, %c0_25, %c0_26], %41 {strides = array<i32>} : memref<1x8x128xf32, #tpu.memory_space<vmem>>, vector<1x8x128xf32>,
    return
  }
  func.func @transform_0(%arg0: i32, %arg1: i32) -> (i32, i32) {
    %c1_i32 = arith.constant 1 : i32
    %0 = arith.muli %arg0, %c1_i32 : i32
    %1 = arith.addi %0, %arg1 : i32
    %c0_i32 = arith.constant 0 : i32
    %c0_i32_0 = arith.constant 0 : i32
    return %1, %c0_i32 : i32, i32
  }
  func.func @transform_1(%arg0: i32, %arg1: i32) -> (i32, i32) {
    %c1_i32 = arith.constant 1 : i32
    %0 = arith.muli %arg0, %c1_i32 : i32
    %1 = arith.addi %0, %arg1 : i32
    %c0_i32 = arith.constant 0 : i32
    %c0_i32_0 = arith.constant 0 : i32
    return %1, %c0_i32 : i32, i32
  }
  func.func @transform_2(%arg0: i32, %arg1: i32) -> (i32, i32, i32) {
    %c0_i32 = arith.constant 0 : i32
    %c0_i32_0 = arith.constant 0 : i32
    %c0_i32_1 = arith.constant 0 : i32
    return %arg0, %c0_i32, %c0_i32_0 : i32, i32, i32
  }
  func.func @transform_3(%arg0: i32, %arg1: i32) -> (i32, i32, i32) {
    %c0_i32 = arith.constant 0 : i32
    %c0_i32_0 = arith.constant 0 : i32
    %c0_i32_1 = arith.constant 0 : i32
    return %arg0, %c0_i32, %c0_i32_0 : i32, i32, i32
  }
  func.func @transform_4(%arg0: i32, %arg1: i32) -> (i32, i32, i32) {
    %c0_i32 = arith.constant 0 : i32
    %c0_i32_0 = arith.constant 0 : i32
    %c0_i32_1 = arith.constant 0 : i32
    return %arg0, %c0_i32, %c0_i32_0 : i32, i32, i32
  }
}

</mosaic_0001>

<llo_original>
// kernel: tpu_custom_call.1
$region0: #{tpu_custom_call.1}
  #allocation0 [shape = 'u32[]', space=smem, size = 0x4, offset = 0x4, fixed_abs, tag = 'smem constant byte address 0x4 - core index']
  #allocation1 [shape = 'u32[72,128]{1,0:T(1,128)}', space=vmem, size = 0x9000, scoped, tag = 'internal scratch']
  %s0 = inlined_call_operand.hbm [shape: f32[16,128], index: 0, kind: input, shape index: {}]
  %s1 = inlined_call_operand.hbm [shape: f32[16,128], index: 1, kind: input, shape index: {}]
  %s2 = inlined_call_operand.hbm [shape: f32[1,8,128], index: 2, kind: output, shape index: {0}]
  %s3 = inlined_call_operand.hbm [shape: f32[1,8,128], index: 3, kind: output, shape index: {1}]
  %s4 = inlined_call_operand.hbm [shape: f32[1,8,128], index: 4, kind: output, shape index: {2}]
  %5 = xla_tuple %s2, %s3, %s4
  %s6 = sld [smem:[#allocation0]]
  $region46: #{tpu_custom_call.1} parent=0
    _
  %s8 = ssub.s32 1, %s6
  %s9 = scalar_select 0, %s8, %s6
  $region1: #{tpu_custom_call.1} parent=0
    #allocation2 [shape = 'u8[8192]{0}', space=vmem, size = 0x2000, scoped, tag = 'input window, operand 0, single buffered']
    #allocation3 [shape = 's32[1]{0}', space=sflag, size = 0x4, scoped, tag = 'scoped memory for tpu_custom_call.1']
    #allocation4 [shape = 's32[1]{0}', space=sflag, size = 0x4, scoped, tag = 'scoped memory for tpu_custom_call.1']
    #allocation5 [shape = 'u8[8192]{0}', space=vmem, size = 0x2000, scoped, tag = 'input window, operand 1, single buffered']
    #allocation6 [shape = 's32[1]{0}', space=sflag, size = 0x4, scoped, tag = 'scoped memory for tpu_custom_call.1']
    #allocation7 [shape = 'u8[4096]{0}', space=vmem, size = 0x1000, scoped, tag = 'output window, operand 0, single buffered']
    #allocation8 [shape = 'u8[4096]{0}', space=vmem, size = 0x1000, scoped, tag = 'output window, operand 1, single buffered']
    #allocation9 [shape = 's32[1]{0}', space=sflag, size = 0x4, scoped, tag = 'scoped memory for tpu_custom_call.1']
    #allocation10 [shape = 'u8[4096]{0}', space=vmem, size = 0x1000, scoped, tag = 'output window, operand 2, single buffered']
    %10 = vsyncpa [#allocation3], 0
    %11 = vsyncpa [#allocation6], 0
    %12 = vsyncpa [#allocation4], 0
    %13 = vsyncpa [#allocation9], 0
    // Predicated region
    $region2: #{tpu_custom_call.1} parent=1 // pred_check
      _
    $region3: #{tpu_custom_call.1} parent=1 // pred_check_branch
      %15 = sbr.rel (0) target = $region5
    $region4: #{tpu_custom_call.1} parent=1 // pred_region
      %s16 = sadd.s32 0, 0
      %s17 = smul.u32 2, %s16
      %19 = vsyncadd [#allocation3], 0
      %s20 = smul.addr %s17, 8
      %s21 = scalar_lea.hbm %s0, %s20
      %s22 = sshll.u32 %s21, 4
      %s23 = int_to_ptr.hbm [resolvable:$true] %s22
      %s24 = sshll.u32 [#allocation2], 4
      %s25 = int_to_ptr.vmem [resolvable:$true] %s24
      %30 = dma.hbm_to_vmem [thread:$0]  %s23, 256, %s25, [#allocation3], 128, 128, 8
    $region5: #{tpu_custom_call.1} parent=1 // pred_fallthru
      _
    // Predicated region
    $region6: #{tpu_custom_call.1} parent=1 // pred_check
      _
    $region7: #{tpu_custom_call.1} parent=1 // pred_check_branch
      %32 = sbr.rel (0) target = $region9
    $region8: #{tpu_custom_call.1} parent=1 // pred_region
      %s33 = sadd.s32 0, 0
      %s34 = smul.u32 2, %s33
      %36 = vsyncadd [#allocation6], 0
      %s37 = smul.addr %s34, 8
      %s38 = scalar_lea.hbm %s1, %s37
      %s39 = sshll.u32 %s38, 4
      %s40 = int_to_ptr.hbm [resolvable:$true] %s39
      %s41 = sshll.u32 [#allocation5], 4
      %s42 = int_to_ptr.vmem [resolvable:$true] %s41
      %47 = dma.hbm_to_vmem [thread:$0]  %s40, 256, %s42, [#allocation6], 128, 128, 8
    $region9: #{tpu_custom_call.1} parent=1 // pred_fallthru
      _
    // Predicated region
    $region10: #{tpu_custom_call.1} parent=1 // pred_check
      _
    $region11: #{tpu_custom_call.1} parent=1 // pred_check_branch
      %49 = sbr.rel (0) target = $region13
    $region12: #{tpu_custom_call.1} parent=1 // pred_region
      %51 = dma.done [#allocation3], 256
    $region13: #{tpu_custom_call.1} parent=1 // pred_fallthru
      _
    // Predicated region
    $region14: #{tpu_custom_call.1} parent=1 // pred_check
      _
    $region15: #{tpu_custom_call.1} parent=1 // pred_check_branch
      %53 = sbr.rel (0) target = $region17
    $region16: #{tpu_custom_call.1} parent=1 // pred_region
      %55 = dma.done [#allocation6], 256
    $region17: #{tpu_custom_call.1} parent=1 // pred_fallthru
      _
    %s56 = sadd.s32 0, 0
    %s57 = smul.u32 2, %s56
    %s58 = sadd.s32 0, 0
    %s59 = smul.u32 2, %s58
    %p60 = scmp.eq.s32.totalorder 0, 0
    // Predicated region
    $region18: #{tpu_custom_call.1} parent=1 // pred_check
      %p61 = pneg %p60
    $region19: #{tpu_custom_call.1} parent=1 // pred_check_branch
      %63 = sbr.rel (%p61) target = $region21
    $region20: #{tpu_custom_call.1} parent=1 // pred_region
      %64 = vst [vmem:[#allocation7] sm:$0xff] 0.0
      %65 = vst [vmem:[#allocation8] sm:$0xff] 0.0
      %66 = vst [vmem:[#allocation10] sm:$0xff] 0.0
    $region21: #{tpu_custom_call.1} parent=1 // pred_fallthru
      _
    %v67 = vld [vmem:[#allocation2] sm:$0xff]
    %v68 = vld [vmem:[#allocation2 + $0x8] sm:$0xff]
    %v69 = vld [vmem:[#allocation5] sm:$0xff]
    %v70 = vld [vmem:[#allocation5 + $0x8] sm:$0xff]
    %v71 = vmul.f32 %v67, %v69
    %v72 = vmul.f32 %v68, %v70
    %v73 = vlog2.pop %v67
    %v74 = vmul.f32 %v73, 0.6931472
    %v75 = vlog2.pop %v68
    %v76 = vmul.f32 %v75, 0.6931472
    %v77 = vmax.f32 %v74, -100.0
    %v78 = vmax.f32 %v76, -100.0
    %v79 = vsub.f32 1.0, %v67
    %v80 = vsub.f32 1.0, %v68
    %v81 = vlog2.pop %v79
    %v82 = vmul.f32 %v81, 0.6931472
    %v83 = vlog2.pop %v80
    %v84 = vmul.f32 %v83, 0.6931472
    %v85 = vmax.f32 %v82, -100.0
    %v86 = vmax.f32 %v84, -100.0
    %v87 = vsub.f32 %v77, %v85
    %v88 = vsub.f32 %v78, %v86
    %v89 = vmul.f32 %v69, %v87
    %v90 = vmul.f32 %v70, %v88
    %v91 = vadd.f32 %v85, %v89
    %v92 = vadd.f32 %v86, %v90
    %v93 = vld [vmem:[#allocation7] sm:$0xff]
    %v94 = vadd.f32 %v91, %v92
    %v95 = vadd.f32 %v93, %v94
    %96 = vst [vmem:[#allocation7] sm:$0xff] %v95
    %v97 = vld [vmem:[#allocation8] sm:$0xff]
    %v98 = vadd.f32 %v71, %v72
    %v99 = vadd.f32 %v97, %v98
    %100 = vst [vmem:[#allocation8] sm:$0xff] %v99
    %v101 = vld [vmem:[#allocation10] sm:$0xff]
    %v102 = vadd.f32 %v67, %v69
    %v103 = vadd.f32 %v68, %v70
    %v104 = vadd.f32 %v102, %v103
    %v105 = vadd.f32 %v101, %v104
    %106 = vst [vmem:[#allocation10] sm:$0xff] %v105
    // Predicated region
    $region22: #{tpu_custom_call.1} parent=1 // pred_check
      _
    $region23: #{tpu_custom_call.1} parent=1 // pred_check_branch
      %108 = sbr.rel (0) target = $region25
    $region24: #{tpu_custom_call.1} parent=1 // pred_region
      %110 = vsyncadd [#allocation4], 0
      %s112 = sshll.u32 [#allocation7], 4
      %s113 = int_to_ptr.vmem [resolvable:$true] %s112
      %s114 = sshll.u32 %s2, 4
      %s115 = int_to_ptr.hbm [resolvable:$true] %s114
      %117 = dma.vmem_to_hbm [thread:$0]  %s113, 128, %s115, [#allocation4]
    $region25: #{tpu_custom_call.1} parent=1 // pred_fallthru
      _
    // Predicated region
    $region26: #{tpu_custom_call.1} parent=1 // pred_check
      _
    $region27: #{tpu_custom_call.1} parent=1 // pred_check_branch
      %119 = sbr.rel (0) target = $region29
    $region28: #{tpu_custom_call.1} parent=1 // pred_region
      %121 = vsyncadd [#allocation9], 0
      %s123 = sshll.u32 [#allocation8], 4
      %s124 = int_to_ptr.vmem [resolvable:$true] %s123
      %s125 = sshll.u32 %s3, 4
      %s126 = int_to_ptr.hbm [resolvable:$true] %s125
      %128 = dma.vmem_to_hbm [thread:$0]  %s124, 128, %s126, [#allocation9]
    $region29: #{tpu_custom_call.1} parent=1 // pred_fallthru
      _
    // Predicated region
    $region30: #{tpu_custom_call.1} parent=1 // pred_check
      _
    $region31: #{tpu_custom_call.1} parent=1 // pred_check_branch
      %130 = sbr.rel (0) target = $region33
    $region32: #{tpu_custom_call.1} parent=1 // pred_region
      %132 = vsyncadd [#allocation9], 0
      %s134 = sshll.u32 [#allocation10], 4
      %s135 = int_to_ptr.vmem [resolvable:$true] %s134
      %s136 = sshll.u32 %s4, 4
      %s137 = int_to_ptr.hbm [resolvable:$true] %s136
      %139 = dma.vmem_to_hbm [thread:$0]  %s135, 128, %s137, [#allocation9]
    $region33: #{tpu_custom_call.1} parent=1 // pred_fallthru
      _
    // Predicated region
    $region34: #{tpu_custom_call.1} parent=1 // pred_check
      _
    $region35: #{tpu_custom_call.1} parent=1 // pred_check_branch
      %141 = sbr.rel (0) target = $region37
    $region36: #{tpu_custom_call.1} parent=1 // pred_region
      %143 = dma.done [#allocation4], 128
    $region37: #{tpu_custom_call.1} parent=1 // pred_fallthru
      _
    // Predicated region
    $region38: #{tpu_custom_call.1} parent=1 // pred_check
      _
    $region39: #{tpu_custom_call.1} parent=1 // pred_check_branch
      %145 = sbr.rel (0) target = $region41
    $region40: #{tpu_custom_call.1} parent=1 // pred_region
      %147 = dma.done [#allocation9], 128
    $region41: #{tpu_custom_call.1} parent=1 // pred_fallthru
      _
    // Predicated region
    $region42: #{tpu_custom_call.1} parent=1 // pred_check
      _
    $region43: #{tpu_custom_call.1} parent=1 // pred_check_branch
      %149 = sbr.rel (0) target = $region45
    $region44: #{tpu_custom_call.1} parent=1 // pred_region
      %151 = dma.done [#allocation9], 128
    $region45: #{tpu_custom_call.1} parent=1 // pred_fallthru
      _
    %152 = vsyncpa [#allocation3], 1
    %153 = vsyncpa [#allocation6], 1
    %154 = vsyncpa [#allocation4], 1
    %155 = vsyncpa [#allocation9], 1

</llo_original>
